<compile_context>
chip_gen: v6e
topology: v6e:2x2x1
jax: 0.10.0
libtpu: 0.0.40
codegen_flags: <defaults>
</compile_context>

<pallas_src>
import functools

import jax
import jax.numpy as jnp
from jax.experimental import pallas as pl
from jax.experimental.pallas import tpu as pltpu


# ----------------------------- kernels ---------------------------------------


def _pooled_head_nomask_kernel(x_ref, w_ref, out_ref, acc_ref, *, inv_s):
    """Mean pool over S (no mask) + Linear head.  Grid = (b_tiles, s_tiles)."""
    s = pl.program_id(1)

    @pl.when(s == 0)
    def _():
        acc_ref[...] = jnp.zeros_like(acc_ref)

    # x streamed in native dtype; upcast on-chip, accumulate in f32.
    acc_ref[...] += jnp.sum(x_ref[...].astype(jnp.float32), axis=1)       # (Bt, D)

    @pl.when(s == pl.num_programs(1) - 1)
    def _():
        pooled = acc_ref[...] * inv_s                                     # (Bt, D)
        out_ref[...] = jnp.dot(
            pooled, w_ref[...], preferred_element_type=jnp.float32
        ).astype(out_ref.dtype)


def _pooled_head_masked_kernel(x_ref, valid_ref, w_ref, out_ref, acc_ref, cnt_ref):
    """Masked mean pool over S + Linear head.  Grid = (b_tiles, s_tiles)."""
    s = pl.program_id(1)

    @pl.when(s == 0)
    def _():
        acc_ref[...] = jnp.zeros_like(acc_ref)
        cnt_ref[...] = jnp.zeros_like(cnt_ref)

    x = x_ref[...].astype(jnp.float32)                                    # (Bt, St, D)
    v = valid_ref[...]                                                    # (Bt, St) f32
    acc_ref[...] += jnp.sum(x * v[:, :, None], axis=1)                    # (Bt, D)
    cnt_ref[...] += jnp.sum(v, axis=1, keepdims=True)                     # (Bt, 1)

    @pl.when(s == pl.num_programs(1) - 1)
    def _():
        # TODO(synk): clamp-to-1 makes an all-masked row pool to zeros rather than NaN/inf;
        # confirm against the intended MeanPool1d semantics.
        inv = 1.0 / jnp.maximum(cnt_ref[...], 1.0)                        # (Bt, 1)
        pooled = acc_ref[...] * inv                                       # (Bt, D)
        out_ref[...] = jnp.dot(
            pooled, w_ref[...], preferred_element_type=jnp.float32
        ).astype(out_ref.dtype)


# ----------------------------- wrapper ----------------------------------------


def _largest_divisor_tile(n, max_tile, multiple):
    """Largest divisor of n that is a multiple of `multiple` and <= max_tile, else n (full)."""
    if n <= max_tile:
        return n
    t = (max_tile // multiple) * multiple
    while t >= multiple:
        if n % t == 0:
            return t
        t -= multiple
    return n  # fall back to the full axis (always legal)


def _round_up(v, m):
    return ((v + m - 1) // m) * m


def pooled_head_forward(x, weight, targets, mask=None):
    """JAX/Pallas equivalent of PooledHeadLayer.forward (mean pool, no bias, identity act).

    x:      (B, S, D) any float dtype (streamed natively, accumulated in f32)
    weight: (T, D)    nn.Linear weight layout
    mask:   optional (B, S) bool, True == masked out (default: nothing masked)
    Returns: dict {target_name: (B, 1) array}
    """
    B, S, D = x.shape
    T = weight.shape[0]
    assert weight.shape == (T, D)
    assert len(targets) == T

    out_dtype = jnp.promote_types(x.dtype, weight.dtype)
    w_t = jnp.asarray(weight, jnp.float32).T                              # (D, T), tiny, resident

    # --- tile selection (keep D whole; tile batch & sequence) ------------------
    itemsize = jnp.dtype(x.dtype).itemsize
    X_TILE_BUDGET = 4 * 1024 * 1024            # ~4 MiB per x tile (double-buffer safe on v7x)
    # No-mask path: S tile only needs sublane granularity (packing-aware for bf16/fp8).
    # Masked path: the 2-D (B_tile, S_tile) valid block forces 128-lane granularity.
    s_multiple = 128 if mask is not None else max(8, 32 // itemsize)

    b_budget = max(8, X_TILE_BUDGET // max(1, s_multiple * D * itemsize))
    B_tile = _largest_divisor_tile(B, min(128, b_budget), 8)

    max_s = max(s_multiple, X_TILE_BUDGET // max(1, B_tile * D * itemsize))
    S_tile = _largest_divisor_tile(S, max_s, s_multiple)
    grid = (B // B_tile, S // S_tile)

    # --- VMEM budget (padded to hardware tiles, x2 for double buffering) -------
    D_pad, T_pad = _round_up(D, 128), _round_up(T, 128)
    sub_pack = max(8, 32 // itemsize)
    x_tile_bytes = B_tile * _round_up(S_tile, sub_pack) * D_pad * itemsize
    w_bytes = _round_up(D, 8) * T_pad * 4
    out_bytes = _round_up(B_tile, 8) * T_pad * 4
    acc_bytes = _round_up(B_tile, 8) * D_pad * 4
    cnt_bytes = _round_up(B_tile, 8) * 128 * 4 if mask is not None else 0
    valid_bytes = _round_up(B_tile, 8) * _round_up(S_tile, 128) * 4 if mask is not None else 0
    footprint = 2 * (x_tile_bytes + w_bytes + out_bytes + valid_bytes) + acc_bytes + cnt_bytes
    vmem_limit = int(min(max(2 * footprint, 4 << 20), 32 << 20))

    compiler_params = pltpu.CompilerParams(
        dimension_semantics=("parallel", "arbitrary"),   # batch parallel, S is the reduction
        vmem_limit_bytes=vmem_limit,
    )

    out_shape = jax.ShapeDtypeStruct((B, T), out_dtype)
    x_spec = pl.BlockSpec((B_tile, S_tile, D), lambda b, s: (b, s, 0))
    w_spec = pl.BlockSpec((D, T), lambda b, s: (0, 0))                    # resident across grid
    out_spec = pl.BlockSpec((B_tile, T), lambda b, s: (b, 0))             # resident across S

    if mask is None:
        kernel = functools.partial(_pooled_head_nomask_kernel, inv_s=1.0 / float(S))
        out = pl.pallas_call(
            kernel,
            out_shape=out_shape,
            grid_spec=pltpu.PrefetchScalarGridSpec(
                num_scalar_prefetch=0,
                grid=grid,
                in_specs=[x_spec, w_spec],
                out_specs=out_spec,
                scratch_shapes=[pltpu.VMEM((B_tile, D), jnp.float32)],
            ),
            compiler_params=compiler_params,
        )(x, w_t)
    else:
        valid = jnp.logical_not(mask).astype(jnp.float32)                 # (B, S), 1.0 == valid
        valid_spec = pl.BlockSpec((B_tile, S_tile), lambda b, s: (b, s))
        out = pl.pallas_call(
            _pooled_head_masked_kernel,
            out_shape=out_shape,
            grid_spec=pltpu.PrefetchScalarGridSpec(
                num_scalar_prefetch=0,
                grid=grid,
                in_specs=[x_spec, valid_spec, w_spec],
                out_specs=out_spec,
                scratch_shapes=[
                    pltpu.VMEM((B_tile, D), jnp.float32),                 # pooled-sum acc
                    pltpu.VMEM((B_tile, 1), jnp.float32),                 # valid-count acc
                ],
            ),
            compiler_params=compiler_params,
        )(x, valid, w_t)

    # activation = IdentityOperation; per-target dict packaging is plain JAX glue.
    return {key: out[..., i:i + 1] for i, key in enumerate(targets)}


# ----------------------------- demo / self-test --------------------------------


if __name__ == "__main__":
    # Small deterministic example consistent with the module: batch=2, seq=8, d_model=32.
    B, S, D = 2, 8, 32
    targets = ["t0", "t1", "t2"]
    T = len(targets)

    key = jax.random.PRNGKey(0)
    kx, kw, km = jax.random.split(key, 3)
    x = jax.random.normal(kx, (B, S, D), dtype=jnp.float32)
    # Deterministic "nn.Linear(d_model, len(targets), bias=False)" weight, shape (T, D).
    weight = jax.random.normal(kw, (T, D), dtype=jnp.float32) * (1.0 / jnp.sqrt(D))

    # --- default path: mask=None (matches the module's all-False default mask) ---
    res = pooled_head_forward(x, weight, targets)
    jax.block_until_ready(res)
    pooled_ref = jnp.mean(x, axis=1)
    out_ref = pooled_ref @ weight.T
    for i, k in enumerate(targets):
        assert res[k].shape == (B, 1)
        assert jnp.allclose(res[k][:, 0], out_ref[:, i], atol=1e-5, rtol=1e-5)

    # --- masked path ---
    mask = jax.random.bernoulli(km, 0.3, (B, S))
    res_m = pooled_head_forward(x, weight, targets, mask=mask)
    jax.block_until_ready(res_m)
    valid = jnp.logical_not(mask).astype(jnp.float32)
    cnt = jnp.maximum(valid.sum(-1, keepdims=True), 1.0)
    pooled_m = (x * valid[..., None]).sum(1) / cnt
    out_m = pooled_m @ weight.T
    for i, k in enumerate(targets):
        assert res_m[k].shape == (B, 1)
        assert jnp.allclose(res_m[k][:, 0], out_m[:, i], atol=1e-5, rtol=1e-5)

    print("KERNEL_OK")
</pallas_src>

<mosaic_0001>
module attributes {stable_mosaic.version = 11 : i64} {
  func.func @_pooled_head_nomask_kernel(%arg0: i32, %arg1: i32, %arg2: memref<2x8x32xf32, #tpu.memory_space<vmem>>, %arg3: memref<32x3xf32, #tpu.memory_space<vmem>>, %arg4: memref<2x3xf32, #tpu.memory_space<vmem>>, %arg5: memref<2x32xf32, #tpu.memory_space<vmem>>) attributes {dimension_semantics = [#tpu.dimension_semantics<parallel>, #tpu.dimension_semantics<arbitrary>], iteration_bounds = array<i64: 1, 1>, scalar_prefetch = 0 : i64, scratch_operands = 1 : i64, tpu.core_type = #tpu.core_type<tc>, window_params = [{transform_indices = @transform_0, window_bounds = array<i64: 2, 8, 32>}, {pipeline_mode = #tpu.pipeline_mode<synchronous>, transform_indices = @transform_1, window_bounds = array<i64: 32, 3>}, {transform_indices = @transform_2, window_bounds = array<i64: 2, 3>}]} {
    %c0_i32 = arith.constant 0 : i32
    %0 = arith.cmpi eq, %arg1, %c0_i32 : i32
    %1 = arith.extui %0 : i1 to i32
    %c0_i32_0 = arith.constant 0 : i32
    %2 = arith.cmpi ne, %1, %c0_i32_0 : i32
    scf.if %2 {
      %cst_9 = arith.constant 0.000000e+00 : f32
      %11 = vector.broadcast %cst_9 : f32 to vector<2x32xf32>
      %c0_10 = arith.constant 0 : index
      %c0_11 = arith.constant 0 : index
      %12 = vector.load %arg5[%c0_10, %c0_11] : memref<2x32xf32, #tpu.memory_space<vmem>>, vector<2x32xf32>
      tpu.vector_store %arg5[%c0_10, %c0_11], %11 {strides = array<i32>} : memref<2x32xf32, #tpu.memory_space<vmem>>, vector<2x32xf32>,
    } else {
    }
    %c0 = arith.constant 0 : index
    %c0_1 = arith.constant 0 : index
    %3 = vector.load %arg5[%c0, %c0_1] : memref<2x32xf32, #tpu.memory_space<vmem>>, vector<2x32xf32>
    %c0_2 = arith.constant 0 : index
    %c0_3 = arith.constant 0 : index
    %c0_4 = arith.constant 0 : index
    %4 = vector.load %arg2[%c0_2, %c0_3, %c0_4] : memref<2x8x32xf32, #tpu.memory_space<vmem>>, vector<2x8x32xf32>
    %cst = arith.constant dense<0.000000e+00> : vector<2x32xf32>
    %5 = vector.multi_reduction <add>, %4, %cst [1] : vector<2x8x32xf32> to vector<2x32xf32>
    %6 = arith.addf %3, %5 : vector<2x32xf32>
    %c0_5 = arith.constant 0 : index
    %c0_6 = arith.constant 0 : index
    %7 = vector.load %arg5[%c0_5, %c0_6] : memref<2x32xf32, #tpu.memory_space<vmem>>, vector<2x32xf32>
    tpu.vector_store %arg5[%c0_5, %c0_6], %6 {strides = array<i32>} : memref<2x32xf32, #tpu.memory_space<vmem>>, vector<2x32xf32>,
    %c0_i32_7 = arith.constant 0 : i32
    %8 = arith.cmpi eq, %arg1, %c0_i32_7 : i32
    %9 = arith.extui %8 : i1 to i32
    %c0_i32_8 = arith.constant 0 : i32
    %10 = arith.cmpi ne, %9, %c0_i32_8 : i32
    scf.if %10 {
      %c0_9 = arith.constant 0 : index
      %c0_10 = arith.constant 0 : index
      %11 = vector.load %arg5[%c0_9, %c0_10] : memref<2x32xf32, #tpu.memory_space<vmem>>, vector<2x32xf32>
      %cst_11 = arith.constant 1.250000e-01 : f32
      %12 = vector.broadcast %cst_11 : f32 to vector<2x32xf32>
      %13 = arith.mulf %11, %12 : vector<2x32xf32>
      %c0_12 = arith.constant 0 : index
      %c0_13 = arith.constant 0 : index
      %14 = vector.load %arg3[%c0_12, %c0_13] : memref<32x3xf32, #tpu.memory_space<vmem>>, vector<32x3xf32>
      %cst_14 = arith.constant dense<0.000000e+00> : vector<2x3xf32>
      %15 = tpu.matmul %13, %14, %cst_14 {dimension_numbers = #tpu.dot_dimension_numbers<[1], [0], [0], [1], [0, 0, 1, 1], [], []>} : vector<2x32xf32>, vector<32x3xf32>, vector<2x3xf32> -> vector<2x3xf32>
      %c0_15 = arith.constant 0 : index
      %c0_16 = arith.constant 0 : index
      %16 = vector.load %arg4[%c0_15, %c0_16] : memref<2x3xf32, #tpu.memory_space<vmem>>, vector<2x3xf32>
      tpu.vector_store %arg4[%c0_15, %c0_16], %15 {strides = array<i32>} : memref<2x3xf32, #tpu.memory_space<vmem>>, vector<2x3xf32>,
    } else {
    }
    return
  }
  func.func @transform_0(%arg0: i32, %arg1: i32) -> (i32, i32, i32) {
    %c0_i32 = arith.constant 0 : i32
    %c0_i32_0 = arith.constant 0 : i32
    return %arg0, %arg1, %c0_i32 : i32, i32, i32
  }
  func.func @transform_1(%arg0: i32, %arg1: i32) -> (i32, i32) {
    %c0_i32 = arith.constant 0 : i32
    %c0_i32_0 = arith.constant 0 : i32
    %c0_i32_1 = arith.constant 0 : i32
    return %c0_i32, %c0_i32_0 : i32, i32
  }
  func.func @transform_2(%arg0: i32, %arg1: i32) -> (i32, i32) {
    %c0_i32 = arith.constant 0 : i32
    %c0_i32_0 = arith.constant 0 : i32
    return %arg0, %c0_i32 : i32, i32
  }
}

</mosaic_0001>

<llo_original>
// kernel: tpu_custom_call.1
$region0: #{tpu_custom_call.1}
  #allocation0 [shape = 'u32[]', space=smem, size = 0x4, offset = 0x4, fixed_abs, tag = 'smem constant byte address 0x4 - core index']
  #allocation1 [shape = 'u32[144,128]{1,0:T(1,128)}', space=vmem, size = 0x12000, scoped, tag = 'internal scratch']
  #allocation2 [shape = 'f32[2,32]{1,0:T(2,128)}', space=vmem, size = 0x400, scoped, tag = 'scratch operand']
  %s0 = inlined_call_operand.vmem [shape: f32[2,8,32], index: 0, kind: input, shape index: {}]
  %s1 = inlined_call_operand.vmem [shape: f32[32,3], index: 1, kind: input, shape index: {}]
  %s2 = inlined_call_operand.hbm [shape: f32[2,3], index: 2, kind: output, shape index: {}]
  %s3 = sld [smem:[#allocation0]]
  $region26: #{tpu_custom_call.1} parent=0
    _
  %s5 = ssub.s32 1, %s3
  %s6 = scalar_select 0, %s5, %s3
  $region1: #{tpu_custom_call.1} parent=0
    #allocation3 [shape = 'u8[1024]{0}', space=vmem, size = 0x400, scoped, tag = 'output window, operand 0, single buffered']
    #allocation4 [shape = 's32[1]{0}', space=sflag, size = 0x4, scoped, tag = 'scoped memory for tpu_custom_call.1']
    %7 = vsyncpa [#allocation4], 0
    // Predicated region
    $region2: #{tpu_custom_call.1} parent=1 // pred_check
      _
    $region3: #{tpu_custom_call.1} parent=1 // pred_check_branch
      %9 = sbr.rel (0) target = $region5
    $region4: #{tpu_custom_call.1} parent=1 // pred_region
      _
    $region5: #{tpu_custom_call.1} parent=1 // pred_fallthru
      _
    // Predicated region
    $region6: #{tpu_custom_call.1} parent=1 // pred_check
      _
    $region7: #{tpu_custom_call.1} parent=1 // pred_check_branch
      %11 = sbr.rel (0) target = $region9
    $region8: #{tpu_custom_call.1} parent=1 // pred_region
      _
    $region9: #{tpu_custom_call.1} parent=1 // pred_fallthru
      _
    %p12 = scmp.eq.s32.totalorder 0, 0
    // Predicated region
    $region10: #{tpu_custom_call.1} parent=1 // pred_check
      %p13 = pneg %p12
    $region11: #{tpu_custom_call.1} parent=1 // pred_check_branch
      %15 = sbr.rel (%p13) target = $region13
    $region12: #{tpu_custom_call.1} parent=1 // pred_region
      %vm16 = vcmask 254976
      %17 = vst.msk [vmem:[#allocation2] sm:$0x3] %vm16, 0.0
    $region13: #{tpu_custom_call.1} parent=1 // pred_fallthru
      _
    %v18 = vld [vmem:[#allocation2] sm:$0x3]
    %v19 = vld [vmem:[%s0] sm:$0xff]
    %v20 = vld [vmem:[%s0 + $0x8] sm:$0xff]
    %vm21 = vcmask 261120
    %v22 = vsel %vm21, %v19, 0.0
    %v23 = vrot.slane %v22, 4
    %v24 = vadd.f32 %v22, %v23
    %v25 = vrot.slane %v24, 2
    %v26 = vadd.f32 %v24, %v25
    %v27 = vrot.slane %v26, 1
    %v28 = vadd.f32 %v26, %v27
    %v29 = vsel %vm21, %v20, 0.0
    %v30 = vrot.slane %v29, 4
    %v31 = vadd.f32 %v29, %v30
    %v32 = vrot.slane %v31, 2
    %v33 = vadd.f32 %v31, %v32
    %v34 = vrot.slane %v33, 1
    %v35 = vadd.f32 %v33, %v34
    %vm38 = vcmask 1041409
    %v39 = vsel %vm38, %v35, %v28
    %v41 = vadd.f32 %v18, %v39
    %vm42 = vcmask 254976
    %43 = vst.msk [vmem:[#allocation2] sm:$0x3] %vm42, %v41
    // Predicated region
    $region14: #{tpu_custom_call.1} parent=1 // pred_check
      %p44 = pneg %p12
    $region15: #{tpu_custom_call.1} parent=1 // pred_check_branch
      %46 = sbr.rel (%p44) target = $region17
    $region16: #{tpu_custom_call.1} parent=1 // pred_region
      %v47 = vld [vmem:[#allocation2] sm:$0x3]
      %v48 = vmul.f32 %v47, 0.125
      %v49 = vld [vmem:[%s1] sm:$0xff]
      %v50 = vld [vmem:[%s1 + $0x8] sm:$0xff]
      %v51 = vld [vmem:[%s1 + $0x10] sm:$0xff]
      %v52 = vld [vmem:[%s1 + $0x18] sm:$0xff]
      %v54 = vsel %vm21, %v48, 0
      %56 = vmatprep.subr.mxu0 0.0
      %57 = vmatpush1.msra.mxu0 0.0
      %58 = vmatprep.subr.mxu0 0.0
      %59 = vmatpush1.msra.mxu0 0.0
      %60 = vmatprep.subr.mxu0 0.0
      %61 = vmatpush1.msra.mxu0 0.0
      %62 = vmatprep.subr.mxu0 0.0
      %63 = vmatpush1.msra.mxu0 0.0
      %64 = vmatprep.subr.mxu0 0.0
      %65 = vmatpush1.msra.mxu0 0.0
      %66 = vmatprep.subr.mxu0 0.0
      %67 = vmatpush1.msra.mxu0 0.0
      %68 = vmatprep.subr.mxu0 0.0
      %69 = vmatpush1.msra.mxu0 0.0
      %70 = vmatprep.subr.mxu0 0.0
      %71 = vmatpush1.msra.mxu0 0.0
      %72 = vmatprep.subr.mxu0 0.0
      %73 = vmatpush1.msra.mxu0 0.0
      %74 = vmatprep.subr.mxu0 0.0
      %75 = vmatpush1.msra.mxu0 0.0
      %76 = vmatprep.subr.mxu0 0.0
      %77 = vmatpush1.msra.mxu0 0.0
      %78 = vmatprep.subr.mxu0 0.0
      %79 = vmatpush1.msra.mxu0 0.0
      %80 = vmatprep.subr.mxu0 0.0
      %81 = vmatpush1.msra.mxu0 %v52
      %82 = vmatprep.subr.mxu0 0.0
      %83 = vmatpush1.msra.mxu0 %v51
      %84 = vmatprep.subr.mxu0 0.0
      %85 = vmatpush1.msra.mxu0 %v50
      %86 = vmatprep.subr.mxu0 0.0
      %87 = vmatpush1.msra.mxu0 %v49
      %88 = vmatprep.subr.mxu0 0.0
      %89 = vmatpush2.msra.mxu0 0.0
      %90 = vmatprep.subr.mxu0 0.0
      %91 = vmatpush2.msra.mxu0 0.0
      %92 = vmatprep.subr.mxu0 0.0
      %93 = vmatpush2.msra.mxu0 0.0
      %94 = vmatprep.subr.mxu0 0.0
      %95 = vmatpush2.msra.mxu0 0.0
      %96 = vmatprep.subr.mxu0 0.0
      %97 = vmatpush2.msra.mxu0 0.0
      %98 = vmatprep.subr.mxu0 0.0
      %99 = vmatpush2.msra.mxu0 0.0
      %100 = vmatprep.subr.mxu0 0.0
      %101 = vmatpush2.msra.mxu0 0.0
      %102 = vmatprep.subr.mxu0 0.0
      %103 = vmatpush2.msra.mxu0 0.0
      %104 = vmatprep.subr.mxu0 0.0
      %105 = vmatpush2.msra.mxu0 0.0
      %106 = vmatprep.subr.mxu0 0.0
      %107 = vmatpush2.msra.mxu0 0.0
      %108 = vmatprep.subr.mxu0 0.0
      %109 = vmatpush2.msra.mxu0 0.0
      %110 = vmatprep.subr.mxu0 0.0
      %111 = vmatpush2.msra.mxu0 0.0
      %112 = vmatprep.subr.mxu0 0.0
      %113 = vmatpush2.msra.mxu0 0.0
      %114 = vmatprep.subr.mxu0 0.0
      %115 = vmatpush2.msra.mxu0 0.0
      %116 = vmatprep.subr.mxu0 0.0
      %117 = vmatpush2.msra.mxu0 0.0
      %118 = vmatprep.subr.mxu0 0.0
      %119 = vmatpush2.msra.mxu0 0.0
      %120 = vmatprep.mubr.f32.mxu0 0.0
      %121 = vmatmul.mubr.f32.gmra.mxu0 %v54
      %v122 = vpop.f32.mrf.mxu0
      %v123 = vadd.f32 0.0, %v122
      %v124 = vpop.f32.mrf.mxu0
      %125 = vdwg.mxu0
      %vm126 = vcmask 17408
      %127 = vst.msk [vmem:[#allocation3] sm:$0x3] %vm126, %v123
    $region17: #{tpu_custom_call.1} parent=1 // pred_fallthru
      _
    // Predicated region
    $region18: #{tpu_custom_call.1} parent=1 // pred_check
      _
    $region19: #{tpu_custom_call.1} parent=1 // pred_check_branch
      %129 = sbr.rel (0) target = $region21
    $region20: #{tpu_custom_call.1} parent=1 // pred_region
      %s131 = ssub.s32 32, 32
      %132 = vsyncadd [#allocation4], %s131
      %s134 = sshll.u32 [#allocation3], 4
      %s135 = int_to_ptr.vmem [resolvable:$true] %s134
      %137 = dma.vmem_to_hbm [thread:$0]  %s135, 32, %s2, [#allocation4]
    $region21: #{tpu_custom_call.1} parent=1 // pred_fallthru
      _
    // Predicated region
    $region22: #{tpu_custom_call.1} parent=1 // pred_check
      _
    $region23: #{tpu_custom_call.1} parent=1 // pred_check_branch
      %139 = sbr.rel (0) target = $region25
    $region24: #{tpu_custom_call.1} parent=1 // pred_region
      %140 = dma.done [#allocation4], 32
    $region25: #{tpu_custom_call.1} parent=1 // pred_fallthru
      _
    %141 = vsyncpa [#allocation4], 1

</llo_original>
